<compile_context>
chip_gen: v7x
topology: tpu7x:2x2x1
jax: 0.10.0
libtpu: 0.0.40
codegen_flags: <defaults>
</compile_context>

<pallas_src>
import functools

import jax
import jax.numpy as jnp
from jax.experimental import pallas as pl
from jax.experimental.pallas import tpu as pltpu

MARGIN = 0.5        # ContextAdaptiveContrastiveLoss(margin=0.5)
GATE_SCALE = 1.0    # ContextAdaptiveContrastiveLoss(gate_scale=1.0)
_EPS = 1e-8         # matches torch.nn.functional.cosine_similarity eps
_EPS_SQ = _EPS * _EPS


def _round_up(x: int, m: int) -> int:
    return ((x + m - 1) // m) * m


def _final_diff_kernel(tok1_ref, tok2_ref, s1_ref, s2_ref, fd_ref, acc_ref,
                       *, inv_len):
    """Per (batch-tile, L-tile) body: accumulate token cosines, finalize gate."""
    l = pl.program_id(1)

    @pl.when(l == 0)
    def _init():
        acc_ref[...] = jnp.zeros_like(acc_ref)

    # ---- token-level cosine similarity for this (TB, TL, D) tile ----------
    t1 = tok1_ref[...].astype(jnp.float32)                 # (TB, TL, D)
    t2 = tok2_ref[...].astype(jnp.float32)
    dot = jnp.sum(t1 * t2, axis=-1)                        # (TB, TL)
    ss1 = jnp.sum(t1 * t1, axis=-1)
    ss2 = jnp.sum(t2 * t2, axis=-1)
    # max(sqrt(x), eps) == sqrt(max(x, eps^2)); rsqrt issues on the EUP slot.
    cos_tok = (dot
               * jax.lax.rsqrt(jnp.maximum(ss1, _EPS_SQ))
               * jax.lax.rsqrt(jnp.maximum(ss2, _EPS_SQ)))  # zero pads -> 0
    acc_ref[...] += jnp.sum(cos_tok, axis=1, keepdims=True)  # (TB, 1)

    # ---- epilogue: sentence cosine, gate, blended distance -----------------
    @pl.when(l == pl.num_programs(1) - 1)
    def _finalize():
        local_diff = 1.0 - acc_ref[...] * inv_len          # (TB, 1)

        s1 = s1_ref[...].astype(jnp.float32)               # (TB, D)
        s2 = s2_ref[...].astype(jnp.float32)
        sdot = jnp.sum(s1 * s2, axis=-1, keepdims=True)    # (TB, 1)
        sa = jnp.sum(s1 * s1, axis=-1, keepdims=True)
        sb = jnp.sum(s2 * s2, axis=-1, keepdims=True)
        global_diff = 1.0 - (sdot
                             * jax.lax.rsqrt(jnp.maximum(sa, _EPS_SQ))
                             * jax.lax.rsqrt(jnp.maximum(sb, _EPS_SQ)))

        gate = jax.nn.sigmoid(GATE_SCALE * (global_diff - local_diff))
        fd_ref[...] = gate * global_diff + (1.0 - gate) * local_diff


@functools.partial(jax.jit, static_argnames=("tb", "tl"))
def context_adaptive_contrastive_loss(tok1, tok2, sent1, sent2, labels,
                                      *, tb=8, tl=256):
    """tok1: (B, L1, D), tok2: (B, L2, D), sent1/sent2: (B, D), labels: (B,)."""
    # truncate both token sequences to the shared length (static shapes)
    min_len = min(tok1.shape[1], tok2.shape[1])
    t1 = tok1[:, :min_len, :]
    t2 = tok2[:, :min_len, :]
    B, L, D = t1.shape

    # ---- tile sizes + zero padding (static glue) ---------------------------
    TB = max(8, _round_up(tb, 8))
    B_pad = _round_up(B, TB)

    L8 = _round_up(L, 8)
    TL = L8 if L8 <= tl else _round_up(tl, 8)
    L_pad = _round_up(L8, TL)

    if B_pad != B or L_pad != L:
        t1 = jnp.pad(t1, ((0, B_pad - B), (0, L_pad - L), (0, 0)))
        t2 = jnp.pad(t2, ((0, B_pad - B), (0, L_pad - L), (0, 0)))
    s1 = sent1 if B_pad == B else jnp.pad(sent1, ((0, B_pad - B), (0, 0)))
    s2 = sent2 if B_pad == B else jnp.pad(sent2, ((0, B_pad - B), (0, 0)))

    grid = (B_pad // TB, L_pad // TL)
    kernel = functools.partial(_final_diff_kernel, inv_len=1.0 / float(min_len))

    # Per-row blended distance; written once per batch tile (last L step).
    fd = pl.pallas_call(
        kernel,
        out_shape=jax.ShapeDtypeStruct((B_pad, 1), jnp.float32),
        grid_spec=pltpu.PrefetchScalarGridSpec(
            num_scalar_prefetch=0,
            grid=grid,
            in_specs=[
                pl.BlockSpec((TB, TL, D), lambda b, l: (b, l, 0)),
                pl.BlockSpec((TB, TL, D), lambda b, l: (b, l, 0)),
                pl.BlockSpec((TB, D), lambda b, l: (b, 0)),
                pl.BlockSpec((TB, D), lambda b, l: (b, 0)),
            ],
            out_specs=pl.BlockSpec((TB, 1), lambda b, l: (b, 0)),
            scratch_shapes=[pltpu.VMEM((TB, 1), jnp.float32)],
        ),
        compiler_params=pltpu.CompilerParams(
            dimension_semantics=("parallel", "arbitrary"),
            vmem_limit_bytes=64 * 1024 * 1024,
        ),
    )(t1, t2, s1, s2)

    # ---- tiny label-masked reduction (B elements) in plain JAX -------------
    final_diff = fd[:B, 0]
    labels = labels.astype(jnp.int32)
    pos = jnp.sum(jnp.where(labels == 1, final_diff * final_diff, 0.0))
    hinge = jnp.maximum(MARGIN - final_diff, 0.0)
    neg = jnp.sum(jnp.where(labels == 0, hinge * hinge, 0.0))
    return pos + neg


def _reference_loss(tok1, tok2, sent1, sent2, labels):
    """Pure-JAX mirror of the PyTorch forward, for verification."""
    min_len = min(tok1.shape[1], tok2.shape[1])
    t1 = tok1[:, :min_len, :].astype(jnp.float32)
    t2 = tok2[:, :min_len, :].astype(jnp.float32)

    def cos(a, b, axis):
        dot = jnp.sum(a * b, axis=axis)
        na = jnp.maximum(jnp.linalg.norm(a, axis=axis), _EPS)
        nb = jnp.maximum(jnp.linalg.norm(b, axis=axis), _EPS)
        return dot / (na * nb)

    local_diff = 1.0 - cos(t1, t2, -1).mean(axis=1)
    global_diff = 1.0 - cos(sent1.astype(jnp.float32),
                            sent2.astype(jnp.float32), -1)
    gate = jax.nn.sigmoid(GATE_SCALE * (global_diff - local_diff))
    final_diff = gate * global_diff + (1.0 - gate) * local_diff
    pos = jnp.where(labels == 1, final_diff ** 2, 0.0).sum()
    neg = jnp.where(labels == 0,
                    jnp.maximum(MARGIN - final_diff, 0.0) ** 2, 0.0).sum()
    return pos + neg


if __name__ == "__main__":
    key = jax.random.PRNGKey(0)

    # ---- case 1: tiny shapes, single tile -----------------------------------
    k1, k2, k3, k4, k5 = jax.random.split(key, 5)
    B, L1, L2, D = 4, 10, 8, 32
    tok1 = jax.random.normal(k1, (B, L1, D), dtype=jnp.float32)
    tok2 = jax.random.normal(k2, (B, L2, D), dtype=jnp.float32)
    sent1 = tok1.mean(axis=1) + 0.1 * jax.random.normal(k3, (B, D), jnp.float32)
    sent2 = tok2.mean(axis=1) + 0.1 * jax.random.normal(k4, (B, D), jnp.float32)
    labels = jax.random.bernoulli(k5, 0.5, (B,)).astype(jnp.int32)

    loss = context_adaptive_contrastive_loss(tok1, tok2, sent1, sent2, labels)
    jax.block_until_ready(loss)
    ref = _reference_loss(tok1, tok2, sent1, sent2, labels)
    assert jnp.allclose(loss, ref, rtol=1e-4, atol=1e-4), (loss, ref)

    # ---- case 2: multi-tile grid (batch + L padding, L accumulation) --------
    k1, k2, k3, k4, k5 = jax.random.split(jax.random.PRNGKey(1), 5)
    B, L1, L2, D = 12, 40, 37, 32
    tok1 = jax.random.normal(k1, (B, L1, D), dtype=jnp.float32)
    tok2 = jax.random.normal(k2, (B, L2, D), dtype=jnp.float32)
    sent1 = tok1.mean(axis=1) + 0.1 * jax.random.normal(k3, (B, D), jnp.float32)
    sent2 = tok2.mean(axis=1) + 0.1 * jax.random.normal(k4, (B, D), jnp.float32)
    labels = jax.random.bernoulli(k5, 0.5, (B,)).astype(jnp.int32)

    loss2 = context_adaptive_contrastive_loss(tok1, tok2, sent1, sent2, labels,
                                              tb=8, tl=16)
    jax.block_until_ready(loss2)
    ref2 = _reference_loss(tok1, tok2, sent1, sent2, labels)
    assert jnp.allclose(loss2, ref2, rtol=1e-4, atol=1e-4), (loss2, ref2)

    print("KERNEL_OK")
</pallas_src>

<mosaic_0001>
module attributes {stable_mosaic.version = 11 : i64} {
  func.func @_final_diff_kernel(%arg0: i32, %arg1: i32, %arg2: memref<8x8x32xf32, #tpu.memory_space<vmem>>, %arg3: memref<8x8x32xf32, #tpu.memory_space<vmem>>, %arg4: memref<8x32xf32, #tpu.memory_space<vmem>>, %arg5: memref<8x32xf32, #tpu.memory_space<vmem>>, %arg6: memref<8x1xf32, #tpu.memory_space<vmem>>, %arg7: memref<8x1xf32, #tpu.memory_space<vmem>>) attributes {dimension_semantics = [#tpu.dimension_semantics<parallel>, #tpu.dimension_semantics<arbitrary>], iteration_bounds = array<i64: 1, 1>, scalar_prefetch = 0 : i64, scratch_operands = 1 : i64, tpu.core_type = #tpu.core_type<tc>, window_params = [{transform_indices = @transform_0, window_bounds = array<i64: 8, 8, 32>}, {transform_indices = @transform_1, window_bounds = array<i64: 8, 8, 32>}, {transform_indices = @transform_2, window_bounds = array<i64: 8, 32>}, {transform_indices = @transform_3, window_bounds = array<i64: 8, 32>}, {transform_indices = @transform_4, window_bounds = array<i64: 8, 1>}]} {
    %c0_i32 = arith.constant 0 : i32
    %0 = arith.cmpi eq, %arg1, %c0_i32 : i32
    %1 = arith.extui %0 : i1 to i32
    %c0_i32_0 = arith.constant 0 : i32
    %2 = arith.cmpi ne, %1, %c0_i32_0 : i32
    scf.if %2 {
      %cst_17 = arith.constant 0.000000e+00 : f32
      %27 = vector.broadcast %cst_17 : f32 to vector<8x1xf32>
      %c0_18 = arith.constant 0 : index
      %c0_19 = arith.constant 0 : index
      %28 = vector.load %arg7[%c0_18, %c0_19] : memref<8x1xf32, #tpu.memory_space<vmem>>, vector<8x1xf32>
      tpu.vector_store %arg7[%c0_18, %c0_19], %27 {strides = array<i32>} : memref<8x1xf32, #tpu.memory_space<vmem>>, vector<8x1xf32>,
    } else {
    }
    %c0 = arith.constant 0 : index
    %c0_1 = arith.constant 0 : index
    %c0_2 = arith.constant 0 : index
    %3 = vector.load %arg2[%c0, %c0_1, %c0_2] : memref<8x8x32xf32, #tpu.memory_space<vmem>>, vector<8x8x32xf32>
    %c0_3 = arith.constant 0 : index
    %c0_4 = arith.constant 0 : index
    %c0_5 = arith.constant 0 : index
    %4 = vector.load %arg3[%c0_3, %c0_4, %c0_5] : memref<8x8x32xf32, #tpu.memory_space<vmem>>, vector<8x8x32xf32>
    %5 = arith.mulf %3, %4 : vector<8x8x32xf32>
    %cst = arith.constant dense<0.000000e+00> : vector<8x8xf32>
    %6 = vector.multi_reduction <add>, %5, %cst [2] : vector<8x8x32xf32> to vector<8x8xf32>
    %7 = arith.mulf %3, %3 : vector<8x8x32xf32>
    %cst_6 = arith.constant dense<0.000000e+00> : vector<8x8xf32>
    %8 = vector.multi_reduction <add>, %7, %cst_6 [2] : vector<8x8x32xf32> to vector<8x8xf32>
    %9 = arith.mulf %4, %4 : vector<8x8x32xf32>
    %cst_7 = arith.constant dense<0.000000e+00> : vector<8x8xf32>
    %10 = vector.multi_reduction <add>, %9, %cst_7 [2] : vector<8x8x32xf32> to vector<8x8xf32>
    %cst_8 = arith.constant 1.000000e-16 : f32
    %11 = vector.broadcast %cst_8 : f32 to vector<8x8xf32>
    %12 = arith.maximumf %8, %11 : vector<8x8xf32>
    %13 = math.rsqrt %12 : vector<8x8xf32>
    %14 = arith.mulf %6, %13 : vector<8x8xf32>
    %cst_9 = arith.constant 1.000000e-16 : f32
    %15 = vector.broadcast %cst_9 : f32 to vector<8x8xf32>
    %16 = arith.maximumf %10, %15 : vector<8x8xf32>
    %17 = math.rsqrt %16 : vector<8x8xf32>
    %18 = arith.mulf %14, %17 : vector<8x8xf32>
    %c0_10 = arith.constant 0 : index
    %c0_11 = arith.constant 0 : index
    %19 = vector.load %arg7[%c0_10, %c0_11] : memref<8x1xf32, #tpu.memory_space<vmem>>, vector<8x1xf32>
    %cst_12 = arith.constant dense<0.000000e+00> : vector<8xf32>
    %20 = vector.multi_reduction <add>, %18, %cst_12 [1] : vector<8x8xf32> to vector<8xf32>
    %21 = vector.shape_cast %20 : vector<8xf32> to vector<8x1xf32>
    %22 = arith.addf %19, %21 : vector<8x1xf32>
    %c0_13 = arith.constant 0 : index
    %c0_14 = arith.constant 0 : index
    %23 = vector.load %arg7[%c0_13, %c0_14] : memref<8x1xf32, #tpu.memory_space<vmem>>, vector<8x1xf32>
    tpu.vector_store %arg7[%c0_13, %c0_14], %22 {strides = array<i32>} : memref<8x1xf32, #tpu.memory_space<vmem>>, vector<8x1xf32>,
    %c0_i32_15 = arith.constant 0 : i32
    %24 = arith.cmpi eq, %arg1, %c0_i32_15 : i32
    %25 = arith.extui %24 : i1 to i32
    %c0_i32_16 = arith.constant 0 : i32
    %26 = arith.cmpi ne, %25, %c0_i32_16 : i32
    scf.if %26 {
      %c0_17 = arith.constant 0 : index
      %c0_18 = arith.constant 0 : index
      %27 = vector.load %arg7[%c0_17, %c0_18] : memref<8x1xf32, #tpu.memory_space<vmem>>, vector<8x1xf32>
      %cst_19 = arith.constant 1.250000e-01 : f32
      %28 = vector.broadcast %cst_19 : f32 to vector<8x1xf32>
      %29 = arith.mulf %27, %28 : vector<8x1xf32>
      %cst_20 = arith.constant 1.000000e+00 : f32
      %30 = vector.broadcast %cst_20 : f32 to vector<8x1xf32>
      %31 = arith.subf %30, %29 : vector<8x1xf32>
      %c0_21 = arith.constant 0 : index
      %c0_22 = arith.constant 0 : index
      %32 = vector.load %arg4[%c0_21, %c0_22] : memref<8x32xf32, #tpu.memory_space<vmem>>, vector<8x32xf32>
      %c0_23 = arith.constant 0 : index
      %c0_24 = arith.constant 0 : index
      %33 = vector.load %arg5[%c0_23, %c0_24] : memref<8x32xf32, #tpu.memory_space<vmem>>, vector<8x32xf32>
      %34 = arith.mulf %32, %33 : vector<8x32xf32>
      %cst_25 = arith.constant dense<0.000000e+00> : vector<8xf32>
      %35 = vector.multi_reduction <add>, %34, %cst_25 [1] : vector<8x32xf32> to vector<8xf32>
      %36 = vector.shape_cast %35 : vector<8xf32> to vector<8x1xf32>
      %37 = arith.mulf %32, %32 : vector<8x32xf32>
      %cst_26 = arith.constant dense<0.000000e+00> : vector<8xf32>
      %38 = vector.multi_reduction <add>, %37, %cst_26 [1] : vector<8x32xf32> to vector<8xf32>
      %39 = vector.shape_cast %38 : vector<8xf32> to vector<8x1xf32>
      %40 = arith.mulf %33, %33 : vector<8x32xf32>
      %cst_27 = arith.constant dense<0.000000e+00> : vector<8xf32>
      %41 = vector.multi_reduction <add>, %40, %cst_27 [1] : vector<8x32xf32> to vector<8xf32>
      %42 = vector.shape_cast %41 : vector<8xf32> to vector<8x1xf32>
      %cst_28 = arith.constant 1.000000e-16 : f32
      %43 = vector.broadcast %cst_28 : f32 to vector<8x1xf32>
      %44 = arith.maximumf %39, %43 : vector<8x1xf32>
      %45 = math.rsqrt %44 : vector<8x1xf32>
      %46 = arith.mulf %36, %45 : vector<8x1xf32>
      %cst_29 = arith.constant 1.000000e-16 : f32
      %47 = vector.broadcast %cst_29 : f32 to vector<8x1xf32>
      %48 = arith.maximumf %42, %47 : vector<8x1xf32>
      %49 = math.rsqrt %48 : vector<8x1xf32>
      %50 = arith.mulf %46, %49 : vector<8x1xf32>
      %cst_30 = arith.constant 1.000000e+00 : f32
      %51 = vector.broadcast %cst_30 : f32 to vector<8x1xf32>
      %52 = arith.subf %51, %50 : vector<8x1xf32>
      %53 = arith.subf %52, %31 : vector<8x1xf32>
      %cst_31 = arith.constant 1.000000e+00 : f32
      %54 = vector.broadcast %cst_31 : f32 to vector<8x1xf32>
      %55 = arith.mulf %54, %53 : vector<8x1xf32>
      %56 = arith.negf %55 : vector<8x1xf32>
      %57 = math.exp %56 : vector<8x1xf32>
      %cst_32 = arith.constant 1.000000e+00 : f32
      %58 = vector.broadcast %cst_32 : f32 to vector<8x1xf32>
      %59 = arith.addf %58, %57 : vector<8x1xf32>
      %60 = arith.divf %58, %59 : vector<8x1xf32>
      %61 = arith.mulf %60, %52 : vector<8x1xf32>
      %cst_33 = arith.constant 1.000000e+00 : f32
      %62 = vector.broadcast %cst_33 : f32 to vector<8x1xf32>
      %63 = arith.subf %62, %60 : vector<8x1xf32>
      %64 = arith.mulf %63, %31 : vector<8x1xf32>
      %65 = arith.addf %61, %64 : vector<8x1xf32>
      %c0_34 = arith.constant 0 : index
      %c0_35 = arith.constant 0 : index
      %66 = vector.load %arg6[%c0_34, %c0_35] : memref<8x1xf32, #tpu.memory_space<vmem>>, vector<8x1xf32>
      tpu.vector_store %arg6[%c0_34, %c0_35], %65 {strides = array<i32>} : memref<8x1xf32, #tpu.memory_space<vmem>>, vector<8x1xf32>,
    } else {
    }
    return
  }
  func.func @transform_0(%arg0: i32, %arg1: i32) -> (i32, i32, i32) {
    %c0_i32 = arith.constant 0 : i32
    %c0_i32_0 = arith.constant 0 : i32
    return %arg0, %arg1, %c0_i32 : i32, i32, i32
  }
  func.func @transform_1(%arg0: i32, %arg1: i32) -> (i32, i32, i32) {
    %c0_i32 = arith.constant 0 : i32
    %c0_i32_0 = arith.constant 0 : i32
    return %arg0, %arg1, %c0_i32 : i32, i32, i32
  }
  func.func @transform_2(%arg0: i32, %arg1: i32) -> (i32, i32) {
    %c0_i32 = arith.constant 0 : i32
    %c0_i32_0 = arith.constant 0 : i32
    return %arg0, %c0_i32 : i32, i32
  }
  func.func @transform_3(%arg0: i32, %arg1: i32) -> (i32, i32) {
    %c0_i32 = arith.constant 0 : i32
    %c0_i32_0 = arith.constant 0 : i32
    return %arg0, %c0_i32 : i32, i32
  }
  func.func @transform_4(%arg0: i32, %arg1: i32) -> (i32, i32) {
    %c0_i32 = arith.constant 0 : i32
    %c0_i32_0 = arith.constant 0 : i32
    return %arg0, %c0_i32 : i32, i32
  }
}

</mosaic_0001>

<llo_original>
// kernel: context_adaptive_contrastive_loss.1
$region0: #{context_adaptive_contrastive_loss.1}
  #allocation0 [shape = 'u32[]', space=smem, size = 0x4, offset = 0x4, fixed_abs, tag = 'smem constant byte address 0x4 - core index']
  #allocation1 [shape = 'u32[144,128]{1,0:T(1,128)}', space=vmem, size = 0x12000, scoped, tag = 'internal scratch']
  #allocation2 [shape = 'f32[8,1]{1,0:T(8,128)}', space=vmem, size = 0x1000, scoped, tag = 'scratch operand']
  %s0 = inlined_call_operand.hbm [shape: f32[8,8,32], index: 0, kind: input, shape index: {}]
  %s1 = inlined_call_operand.hbm [shape: f32[8,8,32], index: 1, kind: input, shape index: {}]
  %s2 = inlined_call_operand.hbm [shape: f32[8,32], index: 2, kind: input, shape index: {}]
  %s3 = inlined_call_operand.hbm [shape: f32[8,32], index: 3, kind: input, shape index: {}]
  %s4 = inlined_call_operand.hbm [shape: f32[8,1], index: 4, kind: output, shape index: {}]
  %s5 = sld [smem:[#allocation0]]
  $region50: #{context_adaptive_contrastive_loss.1} parent=0
    _
  %s7 = ssub.s32 1, %s5
  %s8 = scalar_select 0, %s7, %s5
  $region1: #{context_adaptive_contrastive_loss.1} parent=0
    #allocation3 [shape = 'u8[32768]{0}', space=vmem, size = 0x8000, scoped, tag = 'input window, operand 0, single buffered']
    #allocation4 [shape = 's32[1]{0}', space=sflag, size = 0x4, scoped, tag = 'scoped memory for context_adaptive_contrastive_loss.1']
    #allocation5 [shape = 's32[1]{0}', space=sflag, size = 0x4, scoped, tag = 'scoped memory for context_adaptive_contrastive_loss.1']
    #allocation6 [shape = 'u8[32768]{0}', space=vmem, size = 0x8000, scoped, tag = 'input window, operand 1, single buffered']
    #allocation7 [shape = 's32[1]{0}', space=sflag, size = 0x4, scoped, tag = 'scoped memory for context_adaptive_contrastive_loss.1']
    #allocation8 [shape = 'u8[4096]{0}', space=vmem, size = 0x1000, scoped, tag = 'input window, operand 2, single buffered']
    #allocation9 [shape = 'u8[4096]{0}', space=vmem, size = 0x1000, scoped, tag = 'input window, operand 3, single buffered']
    #allocation10 [shape = 's32[1]{0}', space=sflag, size = 0x4, scoped, tag = 'scoped memory for context_adaptive_contrastive_loss.1']
    #allocation11 [shape = 'u8[4096]{0}', space=vmem, size = 0x1000, scoped, tag = 'output window, operand 0, single buffered']
    %9 = vsyncpa [#allocation4], 0
    %10 = vsyncpa [#allocation7], 0
    %11 = vsyncpa [#allocation10], 0
    %12 = vsyncpa [#allocation5], 0
    // Predicated region
    $region2: #{context_adaptive_contrastive_loss.1} parent=1 // pred_check
      _
    $region3: #{context_adaptive_contrastive_loss.1} parent=1 // pred_check_branch
      %14 = sbr.rel (0) target = $region5
    $region4: #{context_adaptive_contrastive_loss.1} parent=1 // pred_region
      %s16 = ssub.s32 1024, 1024
      %17 = vsyncadd [#allocation4], %s16
      %s18 = sshll.u32 [#allocation3], 4
      %s19 = int_to_ptr.vmem [resolvable:$true] %s18
      %24 = dma.hbm_to_vmem [thread:$0]  %s0, 1024, %s19, [#allocation4], 128, 128, 8
    $region5: #{context_adaptive_contrastive_loss.1} parent=1 // pred_fallthru
      _
    // Predicated region
    $region6: #{context_adaptive_contrastive_loss.1} parent=1 // pred_check
      _
    $region7: #{context_adaptive_contrastive_loss.1} parent=1 // pred_check_branch
      %26 = sbr.rel (0) target = $region9
    $region8: #{context_adaptive_contrastive_loss.1} parent=1 // pred_region
      %s28 = ssub.s32 1024, 1024
      %29 = vsyncadd [#allocation7], %s28
      %s30 = sshll.u32 [#allocation6], 4
      %s31 = int_to_ptr.vmem [resolvable:$true] %s30
      %36 = dma.hbm_to_vmem [thread:$0]  %s1, 1024, %s31, [#allocation7], 128, 128, 8
    $region9: #{context_adaptive_contrastive_loss.1} parent=1 // pred_fallthru
      _
    // Predicated region
    $region10: #{context_adaptive_contrastive_loss.1} parent=1 // pred_check
      _
    $region11: #{context_adaptive_contrastive_loss.1} parent=1 // pred_check_branch
      %38 = sbr.rel (0) target = $region13
    $region12: #{context_adaptive_contrastive_loss.1} parent=1 // pred_region
      %s40 = ssub.s32 128, 128
      %41 = vsyncadd [#allocation7], %s40
      %s43 = sshll.u32 [#allocation8], 4
      %s44 = int_to_ptr.vmem [resolvable:$true] %s43
      %46 = dma.hbm_to_vmem [thread:$0]  %s2, 128, %s44, [#allocation7]
    $region13: #{context_adaptive_contrastive_loss.1} parent=1 // pred_fallthru
      _
    // Predicated region
    $region14: #{context_adaptive_contrastive_loss.1} parent=1 // pred_check
      _
    $region15: #{context_adaptive_contrastive_loss.1} parent=1 // pred_check_branch
      %48 = sbr.rel (0) target = $region17
    $region16: #{context_adaptive_contrastive_loss.1} parent=1 // pred_region
      %s50 = ssub.s32 128, 128
      %51 = vsyncadd [#allocation10], %s50
      %s53 = sshll.u32 [#allocation9], 4
      %s54 = int_to_ptr.vmem [resolvable:$true] %s53
      %56 = dma.hbm_to_vmem [thread:$0]  %s3, 128, %s54, [#allocation10]
    $region17: #{context_adaptive_contrastive_loss.1} parent=1 // pred_fallthru
      _
    // Predicated region
    $region18: #{context_adaptive_contrastive_loss.1} parent=1 // pred_check
      _
    $region19: #{context_adaptive_contrastive_loss.1} parent=1 // pred_check_branch
      %58 = sbr.rel (0) target = $region21
    $region20: #{context_adaptive_contrastive_loss.1} parent=1 // pred_region
      %59 = dma.done [#allocation4], 1024
    $region21: #{context_adaptive_contrastive_loss.1} parent=1 // pred_fallthru
      _
    // Predicated region
    $region22: #{context_adaptive_contrastive_loss.1} parent=1 // pred_check
      _
    $region23: #{context_adaptive_contrastive_loss.1} parent=1 // pred_check_branch
      %61 = sbr.rel (0) target = $region25
    $region24: #{context_adaptive_contrastive_loss.1} parent=1 // pred_region
      %62 = dma.done [#allocation7], 1024
    $region25: #{context_adaptive_contrastive_loss.1} parent=1 // pred_fallthru
      _
    // Predicated region
    $region26: #{context_adaptive_contrastive_loss.1} parent=1 // pred_check
      _
    $region27: #{context_adaptive_contrastive_loss.1} parent=1 // pred_check_branch
      %64 = sbr.rel (0) target = $region29
    $region28: #{context_adaptive_contrastive_loss.1} parent=1 // pred_region
      %65 = dma.done [#allocation7], 128
    $region29: #{context_adaptive_contrastive_loss.1} parent=1 // pred_fallthru
      _
    // Predicated region
    $region30: #{context_adaptive_contrastive_loss.1} parent=1 // pred_check
      _
    $region31: #{context_adaptive_contrastive_loss.1} parent=1 // pred_check_branch
      %67 = sbr.rel (0) target = $region33
    $region32: #{context_adaptive_contrastive_loss.1} parent=1 // pred_region
      %68 = dma.done [#allocation10], 128
    $region33: #{context_adaptive_contrastive_loss.1} parent=1 // pred_fallthru
      _
    %p69 = scmp.eq.s32.totalorder 0, 0
    // Predicated region
    $region34: #{context_adaptive_contrastive_loss.1} parent=1 // pred_check
      %p70 = pneg %p69
    $region35: #{context_adaptive_contrastive_loss.1} parent=1 // pred_check_branch
      %72 = sbr.rel (%p70) target = $region37
    $region36: #{context_adaptive_contrastive_loss.1} parent=1 // pred_region
      %vm73 = vcmask 7168
      %74 = vst.msk [vmem:[#allocation2] sm:$0xff] %vm73, 0.0
    $region37: #{context_adaptive_contrastive_loss.1} parent=1 // pred_fallthru
      _
    %v75 = vld [vmem:[#allocation3] sm:$0xff]
    %v76 = vld [vmem:[#allocation3 + $0x8] sm:$0xff]
    %v77 = vld [vmem:[#allocation3 + $0x10] sm:$0xff]
    %v78 = vld [vmem:[#allocation3 + $0x18] sm:$0xff]
    %v79 = vld [vmem:[#allocation3 + $0x20] sm:$0xff]
    %v80 = vld [vmem:[#allocation3 + $0x28] sm:$0xff]
    %v81 = vld [vmem:[#allocation3 + $0x30] sm:$0xff]
    %v82 = vld [vmem:[#allocation3 + $0x38] sm:$0xff]
    %v83 = vld [vmem:[#allocation6] sm:$0xff]
    %v84 = vld [vmem:[#allocation6 + $0x8] sm:$0xff]
    %v85 = vld [vmem:[#allocation6 + $0x10] sm:$0xff]
    %v86 = vld [vmem:[#allocation6 + $0x18] sm:$0xff]
    %v87 = vld [vmem:[#allocation6 + $0x20] sm:$0xff]
    %v88 = vld [vmem:[#allocation6 + $0x28] sm:$0xff]
    %v89 = vld [vmem:[#allocation6 + $0x30] sm:$0xff]
    %v90 = vld [vmem:[#allocation6 + $0x38] sm:$0xff]
    %v91 = vmul.f32 %v75, %v83
    %v92 = vmul.f32 %v76, %v84
    %v93 = vmul.f32 %v77, %v85
    %v94 = vmul.f32 %v78, %v86
    %v95 = vmul.f32 %v79, %v87
    %v96 = vmul.f32 %v80, %v88
    %v97 = vmul.f32 %v81, %v89
    %v98 = vmul.f32 %v82, %v90
    %vm99 = vcmask 261120
    %v100 = vsel %vm99, %v91, 0.0
    %101 = vadd.xlane.f32.xlu0 %v100
    %v102 = vpop.xlane.xlu0 %101
    %v103 = vsel %vm99, %v92, 0.0
    %104 = vadd.xlane.f32.xlu0 %v103
    %v105 = vpop.xlane.xlu0 %104
    %v106 = vsel %vm99, %v93, 0.0
    %107 = vadd.xlane.f32.xlu0 %v106
    %v108 = vpop.xlane.xlu0 %107
    %v109 = vsel %vm99, %v94, 0.0
    %110 = vadd.xlane.f32.xlu0 %v109
    %v111 = vpop.xlane.xlu0 %110
    %v112 = vsel %vm99, %v95, 0.0
    %113 = vadd.xlane.f32.xlu0 %v112
    %v114 = vpop.xlane.xlu0 %113
    %v115 = vsel %vm99, %v96, 0.0
    %116 = vadd.xlane.f32.xlu0 %v115
    %v117 = vpop.xlane.xlu0 %116
    %v118 = vsel %vm99, %v97, 0.0
    %119 = vadd.xlane.f32.xlu0 %v118
    %v120 = vpop.xlane.xlu0 %119
    %v121 = vsel %vm99, %v98, 0.0
    %122 = vadd.xlane.f32.xlu0 %v121
    %v123 = vpop.xlane.xlu0 %122
    %v124 = vmul.f32 %v75, %v75
    %v125 = vmul.f32 %v76, %v76
    %v126 = vmul.f32 %v77, %v77
    %v127 = vmul.f32 %v78, %v78
    %v128 = vmul.f32 %v79, %v79
    %v129 = vmul.f32 %v80, %v80
    %v130 = vmul.f32 %v81, %v81
    %v131 = vmul.f32 %v82, %v82
    %v132 = vsel %vm99, %v124, 0.0
    %133 = vadd.xlane.f32.xlu0 %v132
    %v134 = vpop.xlane.xlu0 %133
    %v135 = vsel %vm99, %v125, 0.0
    %136 = vadd.xlane.f32.xlu0 %v135
    %v137 = vpop.xlane.xlu0 %136
    %v138 = vsel %vm99, %v126, 0.0
    %139 = vadd.xlane.f32.xlu0 %v138
    %v140 = vpop.xlane.xlu0 %139
    %v141 = vsel %vm99, %v127, 0.0
    %142 = vadd.xlane.f32.xlu0 %v141
    %v143 = vpop.xlane.xlu0 %142
    %v144 = vsel %vm99, %v128, 0.0
    %145 = vadd.xlane.f32.xlu0 %v144
    %v146 = vpop.xlane.xlu0 %145
    %v147 = vsel %vm99, %v129, 0.0
    %148 = vadd.xlane.f32.xlu0 %v147
    %v149 = vpop.xlane.xlu0 %148
    %v150 = vsel %vm99, %v130, 0.0
    %151 = vadd.xlane.f32.xlu0 %v150
    %v152 = vpop.xlane.xlu0 %151
    %v153 = vsel %vm99, %v131, 0.0
    %154 = vadd.xlane.f32.xlu0 %v153
    %v155 = vpop.xlane.xlu0 %154
    %v156 = vmul.f32 %v83, %v83
    %v157 = vmul.f32 %v84, %v84
    %v158 = vmul.f32 %v85, %v85
    %v159 = vmul.f32 %v86, %v86
    %v160 = vmul.f32 %v87, %v87
    %v161 = vmul.f32 %v88, %v88
    %v162 = vmul.f32 %v89, %v89
    %v163 = vmul.f32 %v90, %v90
    %v164 = vsel %vm99, %v156, 0.0
    %165 = vadd.xlane.f32.xlu0 %v164
    %v166 = vpop.xlane.xlu0 %165
    %v167 = vsel %vm99, %v157, 0.0
    %168 = vadd.xlane.f32.xlu0 %v167
    %v169 = vpop.xlane.xlu0 %168
    %v170 = vsel %vm99, %v158, 0.0
    %171 = vadd.xlane.f32.xlu0 %v170
    %v172 = vpop.xlane.xlu0 %171
    %v173 = vsel %vm99, %v159, 0.0
    %174 = vadd.xlane.f32.xlu0 %v173
    %v175 = vpop.xlane.xlu0 %174
    %v176 = vsel %vm99, %v160, 0.0
    %177 = vadd.xlane.f32.xlu0 %v176
    %v178 = vpop.xlane.xlu0 %177
    %v179 = vsel %vm99, %v161, 0.0
    %180 = vadd.xlane.f32.xlu0 %v179
    %v181 = vpop.xlane.xlu0 %180
    %v182 = vsel %vm99, %v162, 0.0
    %183 = vadd.xlane.f32.xlu0 %v182
    %v184 = vpop.xlane.xlu0 %183
    %v185 = vsel %vm99, %v163, 0.0
    %186 = vadd.xlane.f32.xlu0 %v185
    %v187 = vpop.xlane.xlu0 %186
    %v188 = vmax.f32 %v134, 1e-16
    %v189 = vmax.f32 %v137, 1e-16
    %v190 = vmax.f32 %v140, 1e-16
    %v191 = vmax.f32 %v143, 1e-16
    %v192 = vmax.f32 %v146, 1e-16
    %v193 = vmax.f32 %v149, 1e-16
    %v194 = vmax.f32 %v152, 1e-16
    %v195 = vmax.f32 %v155, 1e-16
    %v196 = vrsqrt.pop %v188
    %v197 = vrsqrt.pop %v189
    %v198 = vrsqrt.pop %v190
    %v199 = vrsqrt.pop %v191
    %v200 = vrsqrt.pop %v192
    %v201 = vrsqrt.pop %v193
    %v202 = vrsqrt.pop %v194
    %v203 = vrsqrt.pop %v195
    %v204 = vmul.f32 %v102, %v196
    %v205 = vmul.f32 %v105, %v197
    %v206 = vmul.f32 %v108, %v198
    %v207 = vmul.f32 %v111, %v199
    %v208 = vmul.f32 %v114, %v200
    %v209 = vmul.f32 %v117, %v201
    %v210 = vmul.f32 %v120, %v202
    %v211 = vmul.f32 %v123, %v203
    %v212 = vmax.f32 %v166, 1e-16
    %v213 = vmax.f32 %v169, 1e-16
    %v214 = vmax.f32 %v172, 1e-16
    %v215 = vmax.f32 %v175, 1e-16
    %v216 = vmax.f32 %v178, 1e-16
    %v217 = vmax.f32 %v181, 1e-16
    %v218 = vmax.f32 %v184, 1e-16
    %v219 = vmax.f32 %v187, 1e-16
    %v220 = vrsqrt.pop %v212
    %v221 = vrsqrt.pop %v213
    %v222 = vrsqrt.pop %v214
    %v223 = vrsqrt.pop %v215
    %v224 = vrsqrt.pop %v216
    %v225 = vrsqrt.pop %v217
    %v226 = vrsqrt.pop %v218
    %v227 = vrsqrt.pop %v219
    %v228 = vmul.f32 %v204, %v220
    %v229 = vmul.f32 %v205, %v221
    %v230 = vmul.f32 %v206, %v222
    %v231 = vmul.f32 %v207, %v223
    %v232 = vmul.f32 %v208, %v224
    %v233 = vmul.f32 %v209, %v225
    %v234 = vmul.f32 %v210, %v226
    %v235 = vmul.f32 %v211, %v227
    %v236 = vld [vmem:[#allocation2] sm:$0xff]
    %v245 = vlaneseq
    %v246 = vand.u32 %v245, 127
    %v247 = vlaneseq
    %v248 = vshrl.u32 %v247, 7
    %v249 = vsub.s32 %v246, %v248
    %v250 = vrot.slane %v228, %v249
    %v251 = vlaneseq
    %v252 = vshrl.u32 %v251, 7
    %v253 = vsub.s32 %v246, %v252
    %v254 = vrot.slane %v229, %v253
    %v255 = vlaneseq
    %v256 = vshrl.u32 %v255, 7
    %v257 = vsub.s32 %v246, %v256
    %v258 = vrot.slane %v230, %v257
    %v259 = vlaneseq
    %v260 = vshrl.u32 %v259, 7
    %v261 = vsub.s32 %v246, %v260
    %v262 = vrot.slane %v231, %v261
    %v263 = vlaneseq
    %v264 = vshrl.u32 %v263, 7
    %v265 = vsub.s32 %v246, %v264
    %v266 = vrot.slane %v232, %v265
    %v267 = vlaneseq
    %v268 = vshrl.u32 %v267, 7
    %v269 = vsub.s32 %v246, %v268
    %v270 = vrot.slane %v233, %v269
    %v271 = vlaneseq
    %v272 = vshrl.u32 %v271, 7
    %v273 = vsub.s32 %v246, %v272
    %v274 = vrot.slane %v234, %v273
    %v275 = vlaneseq
    %v276 = vshrl.u32 %v275, 7
    %v277 = vsub.s32 %v246, %v276
    %v278 = vrot.slane %v235, %v277
    %vm279 = vcmask 1041409
    %v280 = vsel %vm279, %v254, %v250
    %vm281 = vcmask 1042434
    %v282 = vsel %vm281, %v258, %v280
    %vm283 = vcmask 1043459
    %v284 = vsel %vm283, %v262, %v282
    %vm285 = vcmask 1044484
    %v286 = vsel %vm285, %v266, %v284
    %vm287 = vcmask 1045509
    %v288 = vsel %vm287, %v270, %v286
    %vm289 = vcmask 1046534
    %v290 = vsel %vm289, %v274, %v288
    %vm291 = vcmask 1047559
    %v292 = vsel %vm291, %v278, %v290
    %vm294 = vcmask 64512
    %v295 = vsel %vm294, %v292, 0.0
    %296 = vadd.xlane.f32.xlu0 %v295
    %v297 = vpop.xlane.xlu0 %296
    %v298 = vadd.f32 %v236, %v297
    %vm299 = vcmask 7168
    %300 = vst.msk [vmem:[#allocation2] sm:$0xff] %vm299, %v298
    // Predicated region
    $region38: #{context_adaptive_contrastive_loss.1} parent=1 // pred_check
      %p301 = pneg %p69
    $region39: #{context_adaptive_contrastive_loss.1} parent=1 // pred_check_branch
      %303 = sbr.rel (%p301) target = $region41
    $region40: #{context_adaptive_contrastive_loss.1} parent=1 // pred_region
      %v304 = vld [vmem:[#allocation2] sm:$0xff]
      %v305 = vmul.f32 %v304, 0.125
      %v306 = vsub.f32 1.0, %v305
      %v307 = vld [vmem:[#allocation8] sm:$0xff]
      %v308 = vld [vmem:[#allocation9] sm:$0xff]
      %v309 = vmul.f32 %v307, %v308
      %v310 = vsel %vm99, %v309, 0.0
      %311 = vadd.xlane.f32.xlu0 %v310
      %v312 = vpop.xlane.xlu0 %311
      %v313 = vmul.f32 %v307, %v307
      %v314 = vsel %vm99, %v313, 0.0
      %315 = vadd.xlane.f32.xlu0 %v314
      %v316 = vpop.xlane.xlu0 %315
      %v317 = vmul.f32 %v308, %v308
      %v318 = vsel %vm99, %v317, 0.0
      %319 = vadd.xlane.f32.xlu0 %v318
      %v320 = vpop.xlane.xlu0 %319
      %v321 = vmax.f32 %v316, 1e-16
      %v322 = vrsqrt.pop %v321
      %v323 = vmul.f32 %v312, %v322
      %v324 = vmax.f32 %v320, 1e-16
      %v325 = vrsqrt.pop %v324
      %v326 = vmul.f32 %v323, %v325
      %v327 = vsub.f32 1.0, %v326
      %v328 = vsub.f32 %v327, %v306
      %v329 = vxor.u32 %v328, 2147483648
      %v330 = vmul.f32 %v329, 1.442695
      %v331 = vpow.pop %v330
      %v332 = vadd.f32 %v331, 1.0
      %v333 = vrcp.pop %v332
      %v334 = vmul.f32 1.0, %v333
      %v335 = vmul.f32 %v334, %v327
      %v336 = vsub.f32 1.0, %v334
      %v337 = vmul.f32 %v336, %v306
      %v338 = vadd.f32 %v335, %v337
      %339 = vst.msk [vmem:[#allocation11] sm:$0xff] %vm299, %v338
    $region41: #{context_adaptive_contrastive_loss.1} parent=1 // pred_fallthru
      _
    // Predicated region
    $region42: #{context_adaptive_contrastive_loss.1} parent=1 // pred_check
      _
    $region43: #{context_adaptive_contrastive_loss.1} parent=1 // pred_check_branch
      %341 = sbr.rel (0) target = $region45
    $region44: #{context_adaptive_contrastive_loss.1} parent=1 // pred_region
      %s343 = ssub.s32 128, 128
      %344 = vsyncadd [#allocation5], %s343
      %s346 = sshll.u32 [#allocation11], 4
      %s347 = int_to_ptr.vmem [resolvable:$true] %s346
      %349 = dma.vmem_to_hbm [thread:$0]  %s347, 128, %s4, [#allocation5]
    $region45: #{context_adaptive_contrastive_loss.1} parent=1 // pred_fallthru
      _
    // Predicated region
    $region46: #{context_adaptive_contrastive_loss.1} parent=1 // pred_check
      _
    $region47: #{context_adaptive_contrastive_loss.1} parent=1 // pred_check_branch
      %351 = sbr.rel (0) target = $region49
    $region48: #{context_adaptive_contrastive_loss.1} parent=1 // pred_region
      %352 = dma.done [#allocation5], 128
    $region49: #{context_adaptive_contrastive_loss.1} parent=1 // pred_fallthru
      _
    %353 = vsyncpa [#allocation4], 1
    %354 = vsyncpa [#allocation7], 1
    %355 = vsyncpa [#allocation10], 1
    %356 = vsyncpa [#allocation5], 1

</llo_original>
